<compile_context>
chip_gen: v6e
topology: v6e:2x2x1
jax: 0.10.0
libtpu: 0.0.40
codegen_flags: <defaults>
</compile_context>

<pallas_src>
import functools
import math

import jax
import jax.numpy as jnp
from jax.experimental import pallas as pl
from jax.experimental.pallas import tpu as pltpu


VMEM_LIMIT_BYTES = 48 * 1024 * 1024  # headroom below v7x's 64 MiB physical VMEM


def _pick_tile(dim, target, align):
    """Largest tile <= target that is a multiple of `align` and divides `dim`.
    Falls back to the full dimension (always layout-legal)."""
    if dim <= target:
        return dim
    best = None
    t = align
    while t <= target:
        if dim % t == 0:
            best = t
        t += align
    return best if best is not None else dim


# ----------------------------- Pallas kernels ------------------------------

def _linear_kernel(x_ref, w_ref, b_ref, *rest, act, fuse_ln, eps):
    if fuse_ln:
        g_ref, beta_ref, o_ref, acc_ref = rest
    else:
        o_ref, acc_ref = rest

    k = pl.program_id(2)

    @pl.when(k == 0)
    def _():
        acc_ref[...] = jnp.zeros_like(acc_ref)

    # bf16 operands feed the MXU at full rate; accumulate in f32.
    acc_ref[...] += jnp.dot(x_ref[...], w_ref[...],
                            preferred_element_type=jnp.float32)

    @pl.when(k == pl.num_programs(2) - 1)
    def _():
        y = acc_ref[...] + b_ref[...].astype(jnp.float32)
        if act == "gelu":
            # TODO(synk): exact erf-GELU if erf lowering is available; tanh approx used.
            c = 0.7978845608028654  # sqrt(2/pi)
            y = 0.5 * y * (1.0 + jnp.tanh(c * (y + 0.044715 * y * y * y)))
        elif act == "tanh":
            y = jnp.tanh(y)
        if fuse_ln:
            mu = jnp.mean(y, axis=-1, keepdims=True)
            yc = y - mu
            var = jnp.mean(yc * yc, axis=-1, keepdims=True)
            y = yc * jax.lax.rsqrt(var + eps)
            y = y * g_ref[...].astype(jnp.float32) + beta_ref[...].astype(jnp.float32)
        o_ref[...] = y.astype(o_ref.dtype)


def linear(x, w, b, act="none", ln=None, eps=1e-12, out_dtype=jnp.bfloat16,
           tm_target=256, tn_target=512, tk_target=512):
    """y = act(x @ w + b), optionally followed by a fused LayerNorm over the
    output feature dim (requires the N tile to span the full output dim).
    x:(M,K) bf16, w:(K,N) bf16, b:(N,) f32."""
    M, K = x.shape
    Kw, N = w.shape
    assert K == Kw
    fuse_ln = ln is not None

    tm = _pick_tile(M, tm_target, 8)
    tk = _pick_tile(K, tk_target, 128)
    tn = N if fuse_ln else _pick_tile(N, tn_target, 128)
    grid = (M // tm, N // tn, K // tk)

    in_specs = [
        pl.BlockSpec((tm, tk), lambda i, j, k: (i, k)),
        pl.BlockSpec((tk, tn), lambda i, j, k: (k, j)),
        pl.BlockSpec((1, tn), lambda i, j, k: (0, j)),
    ]
    args = [x, w, b.reshape(1, N)]
    if fuse_ln:
        gamma, beta = ln
        in_specs += [
            pl.BlockSpec((1, tn), lambda i, j, k: (0, j)),
            pl.BlockSpec((1, tn), lambda i, j, k: (0, j)),
        ]
        args += [gamma.reshape(1, N), beta.reshape(1, N)]

    flops = 2 * M * N * K
    transcendentals = M * N if (act in ("gelu", "tanh")) else 0
    bytes_accessed = (x.size * x.dtype.itemsize + w.size * w.dtype.itemsize
                      + N * 4 + M * N * jnp.dtype(out_dtype).itemsize)

    return pl.pallas_call(
        functools.partial(_linear_kernel, act=act, fuse_ln=fuse_ln, eps=eps),
        out_shape=jax.ShapeDtypeStruct((M, N), out_dtype),
        grid=grid,
        in_specs=in_specs,
        out_specs=pl.BlockSpec((tm, tn), lambda i, j, k: (i, j)),
        scratch_shapes=[pltpu.VMEM((tm, tn), jnp.float32)],
        compiler_params=pltpu.CompilerParams(
            dimension_semantics=("parallel", "parallel", "arbitrary"),
            vmem_limit_bytes=VMEM_LIMIT_BYTES),
        cost_estimate=pl.CostEstimate(flops=flops,
                                      transcendentals=transcendentals,
                                      bytes_accessed=bytes_accessed),
    )(*args)


def _layernorm_kernel(x_ref, g_ref, b_ref, o_ref, *, eps):
    x = x_ref[...].astype(jnp.float32)
    mu = jnp.mean(x, axis=-1, keepdims=True)
    xc = x - mu
    var = jnp.mean(xc * xc, axis=-1, keepdims=True)
    y = xc * jax.lax.rsqrt(var + eps)
    o_ref[...] = (y * g_ref[...].astype(jnp.float32)
                  + b_ref[...].astype(jnp.float32)).astype(o_ref.dtype)


def layer_norm(x, gamma, beta, eps=1e-12, out_dtype=jnp.bfloat16, tm_target=512):
    """Row-tiled BertLayerNorm over the last dim. x:(M,H)."""
    M, H = x.shape
    tm = _pick_tile(M, tm_target, 8)
    return pl.pallas_call(
        functools.partial(_layernorm_kernel, eps=eps),
        out_shape=jax.ShapeDtypeStruct((M, H), out_dtype),
        grid=(M // tm,),
        in_specs=[
            pl.BlockSpec((tm, H), lambda i: (i, 0)),
            pl.BlockSpec((1, H), lambda i: (0, 0)),
            pl.BlockSpec((1, H), lambda i: (0, 0)),
        ],
        out_specs=pl.BlockSpec((tm, H), lambda i: (i, 0)),
        compiler_params=pltpu.CompilerParams(
            dimension_semantics=("parallel",),
            vmem_limit_bytes=VMEM_LIMIT_BYTES),
    )(x, gamma.reshape(1, H), beta.reshape(1, H))


def _attention_kernel(q_ref, k_ref, v_ref, m_ref, o_ref, *,
                      scale, heads_per_blk, head_dim):
    q = q_ref[0]                                # (S, Hb*D) bf16
    k = k_ref[0]
    v = v_ref[0]
    mask = m_ref[0].astype(jnp.float32)         # (1, S) additive mask
    ctx_heads = []
    for hh in range(heads_per_blk):
        sl = slice(hh * head_dim, (hh + 1) * head_dim)
        qh, kh, vh = q[:, sl], k[:, sl], v[:, sl]
        # Contract the head_dim of both operands directly (no K transpose copy).
        s = jax.lax.dot_general(qh, kh, (((1,), (1,)), ((), ())),
                                preferred_element_type=jnp.float32)
        s = s * scale + mask
        s = s - jnp.max(s, axis=-1, keepdims=True)
        p = jnp.exp(s)
        l = jnp.sum(p, axis=-1, keepdims=True)
        ctx = jnp.dot(p.astype(vh.dtype), vh, preferred_element_type=jnp.float32)
        ctx = ctx * pl.reciprocal(l, approx=True)   # SxD scale on the EUP path
        ctx_heads.append(ctx)
    out = ctx_heads[0] if len(ctx_heads) == 1 else jnp.concatenate(ctx_heads, -1)
    o_ref[0] = out.astype(o_ref.dtype)              # single lane-dense store


def attention(q, k, v, ext_mask, scale, num_heads):
    """Multi-head scaled-dot-product attention.
    q,k,v:(B,S,H) bf16 (head-interleaved columns), ext_mask:(B,1,S) f32.
    Heads are selected via BlockSpec indexing; several heads packed per grid
    step so the lane dim is 128-dense when possible."""
    B, S, H = q.shape
    head_dim = H // num_heads
    heads_per_blk = min(num_heads, max(1, 128 // head_dim))
    while num_heads % heads_per_blk != 0:
        heads_per_blk -= 1
    hg = heads_per_blk * head_dim
    if hg != H and hg % 128 != 0:
        heads_per_blk, hg = num_heads, H      # fall back to layout-legal full-H block
    n_groups = num_heads // heads_per_blk

    # TODO(synk): flash-style KV blocking for long sequences (S^2 scores per group).
    qkv_spec = pl.BlockSpec((1, S, hg), lambda b, g: (b, 0, g))
    return pl.pallas_call(
        functools.partial(_attention_kernel, scale=scale,
                          heads_per_blk=heads_per_blk, head_dim=head_dim),
        out_shape=jax.ShapeDtypeStruct((B, S, H), q.dtype),
        grid=(B, n_groups),
        in_specs=[qkv_spec, qkv_spec, qkv_spec,
                  pl.BlockSpec((1, 1, S), lambda b, g: (b, 0, 0))],
        out_specs=pl.BlockSpec((1, S, hg), lambda b, g: (b, 0, g)),
        compiler_params=pltpu.CompilerParams(
            dimension_semantics=("parallel", "parallel"),
            vmem_limit_bytes=VMEM_LIMIT_BYTES),
    )(q, k, v, ext_mask)


# ----------------------------- parameter setup ------------------------------

def init_params(key, cfg):
    std = 0.02
    H, I = cfg["hidden_size"], cfg["intermediate_size"]
    n_layers = cfg["num_hidden_layers"]
    keys = iter(jax.random.split(key, 4 + 4 * n_layers))

    def dense(k, fin, fout):
        w = (jax.random.normal(k, (fin, fout), jnp.float32) * std).astype(jnp.bfloat16)
        return w, jnp.zeros((fout,), jnp.float32)

    params = {
        "num_heads": cfg["num_attention_heads"],
        "word_emb": jax.random.normal(next(keys), (cfg["vocab_size"], H), jnp.float32) * std,
        "pos_emb": jax.random.normal(next(keys), (cfg["max_position_embeddings"], H), jnp.float32) * std,
        "type_emb": jax.random.normal(next(keys), (cfg["type_vocab_size"], H), jnp.float32) * std,
        "emb_ln_g": jnp.ones((H,), jnp.float32),
        "emb_ln_b": jnp.zeros((H,), jnp.float32),
        "layers": [],
    }
    for _ in range(n_layers):
        w_qkv, b_qkv = dense(next(keys), H, 3 * H)   # fused [Wq | Wk | Wv]
        wo, bo = dense(next(keys), H, H)
        wi, bi = dense(next(keys), H, I)
        wm, bm = dense(next(keys), I, H)
        params["layers"].append({
            "w_qkv": w_qkv, "b_qkv": b_qkv,
            "wo": wo, "bo": bo, "wi": wi, "bi": bi, "wm": wm, "bm": bm,
            "ln1_g": jnp.ones((H,), jnp.float32), "ln1_b": jnp.zeros((H,), jnp.float32),
            "ln2_g": jnp.ones((H,), jnp.float32), "ln2_b": jnp.zeros((H,), jnp.float32),
        })
    wp, bp = dense(next(keys), H, H)
    params["wp"], params["bp"] = wp, bp
    return params


# ----------------------------- model forward -------------------------------

def galaxy_bert_forward(params, input_ids, token_type_ids=None, attention_mask=None):
    B, S = input_ids.shape
    if attention_mask is None:
        attention_mask = jnp.ones_like(input_ids)
    if token_type_ids is None:
        token_type_ids = jnp.zeros_like(input_ids)

    # extended_attention_mask = (1 - mask) * -10000, stored as (B, 1, S)
    ext_mask = (1.0 - attention_mask[:, None, :].astype(jnp.float32)) * -10000.0

    # BertEmbeddings (gathers are XLA glue; the LayerNorm runs in a Pallas kernel)
    pos_ids = jnp.arange(S)
    emb = (params["word_emb"][input_ids]
           + params["pos_emb"][pos_ids][None, :, :]
           + params["type_emb"][token_type_ids])
    H = emb.shape[-1]
    M = B * S
    x = layer_norm(emb.reshape(M, H), params["emb_ln_g"], params["emb_ln_b"])
    # embedding dropout: eval mode -> identity
    # scatter_to_sequence_parallel_region: identity on a single device

    num_heads = params["num_heads"]
    head_dim = H // num_heads
    scale = 1.0 / math.sqrt(head_dim)

    for lp in params["layers"]:
        # --- SPBertAttention: fused QKV projection (x read once) + attention core
        qkv = linear(x, lp["w_qkv"], lp["b_qkv"])                 # (M, 3H) bf16
        q, k, v = jnp.split(qkv.reshape(B, S, 3 * H), 3, axis=-1)
        ctx = attention(q, k, v, ext_mask, scale, num_heads)      # (B, S, H) bf16
        # --- output dense + con1: residual is an explicit zeros tensor and
        #     dropout is eval-mode identity, so con1 == LayerNorm(dense_out);
        #     fused into the matmul epilogue.
        x = linear(ctx.reshape(M, H), lp["wo"], lp["bo"],
                   ln=(lp["ln1_g"], lp["ln1_b"]))
        # --- BertMLP: up-proj + GELU, then down-proj with con2 LayerNorm fused
        h = linear(x, lp["wi"], lp["bi"], act="gelu")
        x = linear(h, lp["wm"], lp["bm"], ln=(lp["ln2_g"], lp["ln2_b"]))

    # gather_from_sequence_parallel_region: identity on a single device
    seq_out = x.reshape(B, S, H)
    # BertPooler: first token -> dense -> tanh
    pooled = linear(seq_out[:, 0, :], params["wp"], params["bp"],
                    act="tanh", out_dtype=jnp.float32)
    return pooled


# --------------------------------- main -------------------------------------

if __name__ == "__main__":
    cfg = dict(
        vocab_size=128,
        hidden_size=32,
        num_attention_heads=2,
        intermediate_size=64,
        num_hidden_layers=2,
        max_position_embeddings=16,
        type_vocab_size=2,
        hidden_dropout_prob=0.1,   # eval mode -> identity
    )
    batch, seq = 2, 8

    key = jax.random.PRNGKey(0)
    pkey, ikey = jax.random.split(key)
    params = init_params(pkey, cfg)

    input_ids = jax.random.randint(ikey, (batch, seq), 0, cfg["vocab_size"], dtype=jnp.int32)
    attention_mask = jnp.ones((batch, seq), jnp.int32).at[1, -2:].set(0)  # pad last 2 of batch 1
    token_type_ids = jnp.zeros((batch, seq), jnp.int32)

    pooled = galaxy_bert_forward(params, input_ids, token_type_ids, attention_mask)
    pooled = jax.block_until_ready(pooled)
    assert pooled.shape == (batch, cfg["hidden_size"])
    assert bool(jnp.all(jnp.isfinite(pooled)))
    print("KERNEL_OK")
</pallas_src>

<mosaic_0001>
module attributes {stable_mosaic.version = 11 : i64} {
  func.func @_layernorm_kernel(%arg0: i32, %arg1: memref<16x32xf32, #tpu.memory_space<vmem>>, %arg2: memref<1x32xf32, #tpu.memory_space<vmem>>, %arg3: memref<1x32xf32, #tpu.memory_space<vmem>>, %arg4: memref<16x32xbf16, #tpu.memory_space<vmem>>) attributes {dimension_semantics = [#tpu.dimension_semantics<parallel>], iteration_bounds = array<i64: 1>, scalar_prefetch = 0 : i64, scratch_operands = 0 : i64, tpu.core_type = #tpu.core_type<tc>, window_params = [{transform_indices = @transform_0, window_bounds = array<i64: 16, 32>}, {pipeline_mode = #tpu.pipeline_mode<synchronous>, transform_indices = @transform_1, window_bounds = array<i64: 1, 32>}, {pipeline_mode = #tpu.pipeline_mode<synchronous>, transform_indices = @transform_2, window_bounds = array<i64: 1, 32>}, {transform_indices = @transform_3, window_bounds = array<i64: 16, 32>}]} {
    %c0 = arith.constant 0 : index
    %c0_0 = arith.constant 0 : index
    %0 = vector.load %arg1[%c0, %c0_0] : memref<16x32xf32, #tpu.memory_space<vmem>>, vector<16x32xf32>
    %cst = arith.constant dense<0.000000e+00> : vector<16xf32>
    %1 = vector.multi_reduction <add>, %0, %cst [1] : vector<16x32xf32> to vector<16xf32>
    %2 = vector.shape_cast %1 : vector<16xf32> to vector<16x1xf32>
    %cst_1 = arith.constant 3.200000e+01 : f32
    %3 = vector.broadcast %cst_1 : f32 to vector<16x1xf32>
    %4 = arith.divf %2, %3 : vector<16x1xf32>
    %5 = vector.broadcast %4 : vector<16x1xf32> to vector<16x32xf32>
    %6 = arith.subf %0, %5 : vector<16x32xf32>
    %7 = arith.mulf %6, %6 : vector<16x32xf32>
    %cst_2 = arith.constant dense<0.000000e+00> : vector<16xf32>
    %8 = vector.multi_reduction <add>, %7, %cst_2 [1] : vector<16x32xf32> to vector<16xf32>
    %9 = vector.shape_cast %8 : vector<16xf32> to vector<16x1xf32>
    %cst_3 = arith.constant 3.200000e+01 : f32
    %10 = vector.broadcast %cst_3 : f32 to vector<16x1xf32>
    %11 = arith.divf %9, %10 : vector<16x1xf32>
    %cst_4 = arith.constant 9.99999996E-13 : f32
    %12 = vector.broadcast %cst_4 : f32 to vector<16x1xf32>
    %13 = arith.addf %11, %12 : vector<16x1xf32>
    %14 = math.rsqrt %13 : vector<16x1xf32>
    %15 = vector.broadcast %14 : vector<16x1xf32> to vector<16x32xf32>
    %16 = arith.mulf %6, %15 : vector<16x32xf32>
    %c0_5 = arith.constant 0 : index
    %c0_6 = arith.constant 0 : index
    %17 = vector.load %arg2[%c0_5, %c0_6] : memref<1x32xf32, #tpu.memory_space<vmem>>, vector<1x32xf32>
    %18 = vector.broadcast %17 : vector<1x32xf32> to vector<16x32xf32>
    %19 = arith.mulf %16, %18 : vector<16x32xf32>
    %c0_7 = arith.constant 0 : index
    %c0_8 = arith.constant 0 : index
    %20 = vector.load %arg3[%c0_7, %c0_8] : memref<1x32xf32, #tpu.memory_space<vmem>>, vector<1x32xf32>
    %21 = vector.broadcast %20 : vector<1x32xf32> to vector<16x32xf32>
    %22 = arith.addf %19, %21 : vector<16x32xf32>
    %23 = arith.truncf %22 : vector<16x32xf32> to vector<16x32xbf16>
    %c0_9 = arith.constant 0 : index
    %c0_10 = arith.constant 0 : index
    %24 = vector.load %arg4[%c0_9, %c0_10] : memref<16x32xbf16, #tpu.memory_space<vmem>>, vector<16x32xbf16>
    tpu.vector_store %arg4[%c0_9, %c0_10], %23 {strides = array<i32>} : memref<16x32xbf16, #tpu.memory_space<vmem>>, vector<16x32xbf16>,
    return
  }
  func.func @transform_0(%arg0: i32) -> (i32, i32) {
    %c0_i32 = arith.constant 0 : i32
    %c0_i32_0 = arith.constant 0 : i32
    return %arg0, %c0_i32 : i32, i32
  }
  func.func @transform_1(%arg0: i32) -> (i32, i32) {
    %c0_i32 = arith.constant 0 : i32
    %c0_i32_0 = arith.constant 0 : i32
    %c0_i32_1 = arith.constant 0 : i32
    return %c0_i32, %c0_i32_0 : i32, i32
  }
  func.func @transform_2(%arg0: i32) -> (i32, i32) {
    %c0_i32 = arith.constant 0 : i32
    %c0_i32_0 = arith.constant 0 : i32
    %c0_i32_1 = arith.constant 0 : i32
    return %c0_i32, %c0_i32_0 : i32, i32
  }
  func.func @transform_3(%arg0: i32) -> (i32, i32) {
    %c0_i32 = arith.constant 0 : i32
    %c0_i32_0 = arith.constant 0 : i32
    return %arg0, %c0_i32 : i32, i32
  }
}

</mosaic_0001>

<llo_original>
// kernel: tpu_custom_call.1
$region0: #{tpu_custom_call.1}
  #allocation0 [shape = 'u32[]', space=smem, size = 0x4, offset = 0x4, fixed_abs, tag = 'smem constant byte address 0x4 - core index']
  #allocation1 [shape = 'u32[144,128]{1,0:T(1,128)}', space=vmem, size = 0x12000, scoped, tag = 'internal scratch']
  %s0 = inlined_call_operand.hbm [shape: f32[16,32], index: 0, kind: input, shape index: {}]
  %s1 = inlined_call_operand.vmem [shape: f32[1,32], index: 1, kind: input, shape index: {}]
  %s2 = inlined_call_operand.vmem [shape: f32[1,32], index: 2, kind: input, shape index: {}]
  %s3 = inlined_call_operand.hbm [shape: bf16[16,32], index: 3, kind: output, shape index: {}]
  %s4 = sld [smem:[#allocation0]]
  $region26: #{tpu_custom_call.1} parent=0
    _
  %s6 = ssub.s32 1, %s4
  %s7 = scalar_select 0, %s6, %s4
  $region1: #{tpu_custom_call.1} parent=0
    #allocation2 [shape = 'u8[8192]{0}', space=vmem, size = 0x2000, scoped, tag = 'input window, operand 0, single buffered']
    #allocation3 [shape = 's32[1]{0}', space=sflag, size = 0x4, scoped, tag = 'scoped memory for tpu_custom_call.1']
    #allocation4 [shape = 's32[1]{0}', space=sflag, size = 0x4, scoped, tag = 'scoped memory for tpu_custom_call.1']
    #allocation5 [shape = 'u8[4096]{0}', space=vmem, size = 0x1000, scoped, tag = 'output window, operand 0, single buffered']
    %8 = vsyncpa [#allocation3], 0
    %9 = vsyncpa [#allocation4], 0
    // Predicated region
    $region2: #{tpu_custom_call.1} parent=1 // pred_check
      _
    $region3: #{tpu_custom_call.1} parent=1 // pred_check_branch
      %11 = sbr.rel (0) target = $region5
    $region4: #{tpu_custom_call.1} parent=1 // pred_region
      %s13 = ssub.s32 256, 256
      %14 = vsyncadd [#allocation3], %s13
      %s15 = sshll.u32 [#allocation2], 4
      %s16 = int_to_ptr.vmem [resolvable:$true] %s15
      %21 = dma.hbm_to_vmem [thread:$0]  %s0, 256, %s16, [#allocation3], 128, 128, 8
    $region5: #{tpu_custom_call.1} parent=1 // pred_fallthru
      _
    // Predicated region
    $region6: #{tpu_custom_call.1} parent=1 // pred_check
      _
    $region7: #{tpu_custom_call.1} parent=1 // pred_check_branch
      %23 = sbr.rel (0) target = $region9
    $region8: #{tpu_custom_call.1} parent=1 // pred_region
      _
    $region9: #{tpu_custom_call.1} parent=1 // pred_fallthru
      _
    // Predicated region
    $region10: #{tpu_custom_call.1} parent=1 // pred_check
      _
    $region11: #{tpu_custom_call.1} parent=1 // pred_check_branch
      %25 = sbr.rel (0) target = $region13
    $region12: #{tpu_custom_call.1} parent=1 // pred_region
      _
    $region13: #{tpu_custom_call.1} parent=1 // pred_fallthru
      _
    // Predicated region
    $region14: #{tpu_custom_call.1} parent=1 // pred_check
      _
    $region15: #{tpu_custom_call.1} parent=1 // pred_check_branch
      %27 = sbr.rel (0) target = $region17
    $region16: #{tpu_custom_call.1} parent=1 // pred_region
      %28 = dma.done [#allocation3], 256
    $region17: #{tpu_custom_call.1} parent=1 // pred_fallthru
      _
    %v29 = vld [vmem:[#allocation2] sm:$0xff]
    %v30 = vld [vmem:[#allocation2 + $0x8] sm:$0xff]
    %vm31 = vcmask 261120
    %v32 = vsel %vm31, %v29, 0.0
    %33 = vadd.xlane.f32.xlu0 %v32
    %v34 = vpop.xlane.xlu0 %33
    %v35 = vsel %vm31, %v30, 0.0
    %36 = vadd.xlane.f32.xlu0 %v35
    %v37 = vpop.xlane.xlu0 %36
    %v38 = vrcp.pop 32.0
    %v39 = vmul.f32 %v34, %v38
    %v40 = vmul.f32 %v37, %v38
    %v41 = vsub.f32 %v29, %v39
    %v42 = vsub.f32 %v30, %v40
    %v43 = vmul.f32 %v41, %v41
    %v44 = vmul.f32 %v42, %v42
    %v45 = vsel %vm31, %v43, 0.0
    %46 = vadd.xlane.f32.xlu0 %v45
    %v47 = vpop.xlane.xlu0 %46
    %v48 = vsel %vm31, %v44, 0.0
    %49 = vadd.xlane.f32.xlu0 %v48
    %v50 = vpop.xlane.xlu0 %49
    %v51 = vmul.f32 %v47, %v38
    %v52 = vmul.f32 %v50, %v38
    %v53 = vadd.f32 %v51, 1e-12
    %v54 = vadd.f32 %v52, 1e-12
    %v55 = vrsqrt.pop %v53
    %v56 = vrsqrt.pop %v54
    %v57 = vmul.f32 %v41, %v55
    %v58 = vmul.f32 %v42, %v56
    %v59 = vld [vmem:[%s1] sm:$0x1]
    %v61 = vlaneseq
    %v62 = vshrl.u32 %v61, 7
    %v63 = vsub.s32 0, %v62
    %v64 = vrot.slane %v59, %v63
    %v66 = vmul.f32 %v57, %v64
    %v67 = vmul.f32 %v58, %v64
    %v68 = vld [vmem:[%s2] sm:$0x1]
    %v70 = vlaneseq
    %v71 = vshrl.u32 %v70, 7
    %v72 = vsub.s32 0, %v71
    %v73 = vrot.slane %v68, %v72
    %v75 = vadd.f32 %v66, %v73
    %v76 = vadd.f32 %v67, %v73
    %v77 = vpack.c.bf16 %v76, %v75
    %v79 = vunpack.c.l.b16 %v77
    %v80 = vunpack.c.h.b16 %v77
    %v81 = vpack.c.b16 %v79, %v79
    %v82 = vpack.c.b16 %v80, %v80
    %vm85 = vcmask 257024
    %86 = vst.msk [vmem:[#allocation5] sm:$0xf] %vm85, %v81
    %87 = vst.msk [vmem:[#allocation5 + $0x4] sm:$0xf] %vm85, %v82
    // Predicated region
    $region18: #{tpu_custom_call.1} parent=1 // pred_check
      _
    $region19: #{tpu_custom_call.1} parent=1 // pred_check_branch
      %89 = sbr.rel (0) target = $region21
    $region20: #{tpu_custom_call.1} parent=1 // pred_region
      %s91 = ssub.s32 128, 128
      %92 = vsyncadd [#allocation4], %s91
      %s93 = sshll.u32 [#allocation5], 4
      %s94 = int_to_ptr.vmem [resolvable:$true] %s93
      %99 = dma.vmem_to_hbm [thread:$0]  %s94, 128, %s3, [#allocation4], 64, 64, 4
    $region21: #{tpu_custom_call.1} parent=1 // pred_fallthru
      _
    // Predicated region
    $region22: #{tpu_custom_call.1} parent=1 // pred_check
      _
    $region23: #{tpu_custom_call.1} parent=1 // pred_check_branch
      %101 = sbr.rel (0) target = $region25
    $region24: #{tpu_custom_call.1} parent=1 // pred_region
      %102 = dma.done [#allocation4], 128
    $region25: #{tpu_custom_call.1} parent=1 // pred_fallthru
      _
    %103 = vsyncpa [#allocation3], 1
    %104 = vsyncpa [#allocation4], 1

</llo_original>
